<compile_context>
chip_gen: v6e
topology: v6e:2x2x1
jax: 0.10.0
libtpu: 0.0.40
codegen_flags: <defaults>
</compile_context>

<pallas_src>
import math

import jax
import jax.numpy as jnp
import numpy as np
from jax.experimental import pallas as pl
from jax.experimental.pallas import tpu as pltpu

# ---------------- configuration (static, compiled into the kernel) ----------------
DIM = 4            # event dim of the data
CONTEXT_DIM = 8    # context dim
N_COMPONENTS = 4   # mixture components K
N_LAYERS = 3       # hidden layers
HIDDEN = 32        # hidden units
RANK = 2           # low-rank factor rank
BATCH = 8          # batch size
BN_EPS = 1e-5
SIGMOID_MEANS = False
LOG2PI = math.log(2.0 * math.pi)
PER_COMP_COV = DIM + DIM * RANK                 # per-component cov params (log-diag + factor)
KD = N_COMPONENTS * DIM                          # lanes of one per-(k, d) slab
HEAD_W = (2 + RANK) * KD + N_COMPONENTS          # fused head width: means|logdiag|fac_r...|logits
VEC_W = max(HIDDEN, HEAD_W)                      # lane width of the small-vector slab
N_VEC_ROWS = 3 * N_LAYERS + 1                    # (b, gamma, beta) per layer + head bias

assert RANK == 2   # kernel uses the closed-form 2x2 capacitance solve
# TODO(synk): general-rank capacitance solve (unrolled Cholesky on (B, K) tiles) for RANK != 2.


# ----------------------------------- kernel ---------------------------------------
def mdn_forward_kernel(x_ref, w_ref, vec_ref, hw_ref, out_ref):
    """Whole forward pass (MLP trunk + low-rank-MVN mixture log-prob) in one kernel.

    x_ref   : (BATCH, HIDDEN + DIM)   lanes [0:HIDDEN) = zero-padded context, [HIDDEN:) = data
    w_ref   : (N_LAYERS*HIDDEN, HIDDEN)  stacked trunk weights (layer 0 zero-padded rows)
    vec_ref : (3*N_LAYERS + 1, VEC_W)    rows 3l..3l+2 = (bias, gamma, beta) of layer l,
                                         row 3*N_LAYERS = fused head bias
    hw_ref  : (HIDDEN, HEAD_W)           fused, column-permuted head weight (d-major layout)
    out_ref : (1, 1)                     scalar loss
    """
    x = x_ref[...]
    h = x[:, :HIDDEN]                         # (B, HIDDEN) zero-padded context
    data = x[:, HIDDEN:HIDDEN + DIM]          # (B, DIM)
    w_slab = w_ref[...]
    vec = vec_ref[...]

    # ---- MLP trunk: Linear -> ELU -> BatchNorm1d (training stats) ----
    for l in range(N_LAYERS):
        W = w_slab[l * HIDDEN:(l + 1) * HIDDEN, :]
        b = vec[3 * l + 0:3 * l + 1, :HIDDEN]
        g = vec[3 * l + 1:3 * l + 2, :HIDDEN]
        be = vec[3 * l + 2:3 * l + 3, :HIDDEN]
        z = jnp.dot(h, W, preferred_element_type=jnp.float32) + b
        # ELU(alpha=1). (PyTorch uses expm1; exp-1 differs only by ~1e-8 near 0.)
        a = jnp.where(z > 0.0, z, jnp.exp(jnp.minimum(z, 0.0)) - 1.0)
        mu = jnp.mean(a, axis=0, keepdims=True)
        var = jnp.mean((a - mu) ** 2, axis=0, keepdims=True)          # biased var
        h = (a - mu) * jax.lax.rsqrt(var + BN_EPS) * g + be

    # ---- single fused head matmul; static lane slices of the (B, HEAD_W) result ----
    head_b = vec[3 * N_LAYERS:3 * N_LAYERS + 1, :HEAD_W]
    head = jnp.dot(h, hw_ref[...], preferred_element_type=jnp.float32) + head_b  # (B, HEAD_W)

    # d-major per-component layout: lane index d*K + k
    means = head[:, 0 * KD:1 * KD]            # (B, KD)
    logdiag = head[:, 1 * KD:2 * KD]          # (B, KD)
    fac0 = head[:, 2 * KD:3 * KD]             # (B, KD)  low-rank factor column r=0
    fac1 = head[:, 3 * KD:4 * KD]             # (B, KD)  low-rank factor column r=1
    logits = head[:, 4 * KD:4 * KD + N_COMPONENTS]   # (B, K)

    if SIGMOID_MEANS:
        means = jax.nn.sigmoid(means)

    # diff in the same d-major layout: block d is data[:, d] broadcast over K lanes
    diff = jnp.concatenate(
        [data[:, d:d + 1] - means[:, d * N_COMPONENTS:(d + 1) * N_COMPONENTS]
         for d in range(DIM)], axis=1)                                # (B, KD)

    diag = jnp.exp(logdiag) + 1e-5                                    # (B, KD)
    inv_diag = 1.0 / diag
    dinv_diff = diff * inv_diag
    log_diag = jnp.log(diag)

    def creduce(v):
        # sum over d within each component: (B, KD) d-major -> (B, K)
        acc = v[:, 0:N_COMPONENTS]
        for d in range(1, DIM):
            acc = acc + v[:, d * N_COMPONENTS:(d + 1) * N_COMPONENTS]
        return acc

    term1 = creduce(diff * dinv_diff)                                 # (B, K)
    b0 = creduce(fac0 * dinv_diff)                                    # W^T D^-1 diff, r=0
    b1 = creduce(fac1 * dinv_diff)                                    # W^T D^-1 diff, r=1
    c00 = creduce(fac0 * fac0 * inv_diag) + 1.0                       # capacitance I + W^T D^-1 W
    c11 = creduce(fac1 * fac1 * inv_diag) + 1.0
    c01 = creduce(fac0 * fac1 * inv_diag)
    sumlogd = creduce(log_diag)

    # closed-form 2x2 capacitance solve (SPD, diagonal >= 1  =>  det >= 1)
    det = c00 * c11 - c01 * c01
    term2 = (c11 * b0 * b0 - 2.0 * c01 * b0 * b1 + c00 * b1 * b1) / det
    logdet = jnp.log(det) + sumlogd
    comp_lp = -0.5 * (DIM * LOG2PI + logdet + term1 - term2)          # (B, K)

    # ---- mixture: log_softmax over K, logsumexp over K, mean over batch ----
    wmax = jnp.max(logits, axis=1, keepdims=True)
    log_mix = logits - wmax - jnp.log(jnp.sum(jnp.exp(logits - wmax), axis=1, keepdims=True))

    combined = log_mix + comp_lp                                      # (B, K)
    cmax = jnp.max(combined, axis=1, keepdims=True)
    lp = cmax + jnp.log(jnp.sum(jnp.exp(combined - cmax), axis=1, keepdims=True))  # (B, 1)

    out_ref[...] = -jnp.mean(lp, axis=0, keepdims=True)               # (1, 1) loss


# --------------------------------- packing / wrapper --------------------------------
def _dmajor(w):
    """(..., K, D) -> (..., D*K) with lane index d*K + k (d-major, component-minor)."""
    return jnp.swapaxes(w, -1, -2).reshape(*w.shape[:-2], DIM * N_COMPONENTS)


def _pack_head(params):
    """Fuse + column-permute the (weights|means|cov) head into one (HIDDEN, HEAD_W) weight."""
    Wm, bm = params["Wm"], params["bm"]          # (H, K*DIM), columns k*DIM + d
    Wc, bc = params["Wc"], params["bc"]          # (H, K*PER_COMP_COV), columns k*PCC + i
    Ww, bw = params["Ww"], params["bw"]          # (H, K)
    H = Wm.shape[0]

    Wm_d = _dmajor(Wm.reshape(H, N_COMPONENTS, DIM))
    bm_d = _dmajor(bm.reshape(1, N_COMPONENTS, DIM))

    Wc3 = Wc.reshape(H, N_COMPONENTS, PER_COMP_COV)
    bc3 = bc.reshape(1, N_COMPONENTS, PER_COMP_COV)
    Wld_d = _dmajor(Wc3[:, :, :DIM])
    bld_d = _dmajor(bc3[:, :, :DIM])
    Wf = Wc3[:, :, DIM:].reshape(H, N_COMPONENTS, DIM, RANK)
    bf = bc3[:, :, DIM:].reshape(1, N_COMPONENTS, DIM, RANK)

    W_parts = [Wm_d, Wld_d] + [_dmajor(Wf[..., r]) for r in range(RANK)] + [Ww]
    b_parts = [bm_d, bld_d] + [_dmajor(bf[..., r]) for r in range(RANK)] + [bw]
    return jnp.concatenate(W_parts, axis=1), jnp.concatenate(b_parts, axis=1)   # (H, HEAD_W), (1, HEAD_W)


def _pack_inputs(data, context, params):
    # activations slab: [zero-padded context | data]
    ctx_pad = jnp.zeros((BATCH, HIDDEN), jnp.float32).at[:, :CONTEXT_DIM].set(context)
    x_slab = jnp.concatenate([ctx_pad, data], axis=1)                 # (B, HIDDEN+DIM)

    # trunk weight slab (layer 0 input zero-padded from CONTEXT_DIM to HIDDEN)
    w_blocks = []
    for (W, _, _, _) in params["layers"]:
        Wp = jnp.zeros((HIDDEN, HIDDEN), jnp.float32).at[:W.shape[0], :].set(W)
        w_blocks.append(Wp)
    w_slab = jnp.concatenate(w_blocks, axis=0)                        # (N_LAYERS*HIDDEN, HIDDEN)

    head_w, head_b = _pack_head(params)                               # (HIDDEN, HEAD_W), (1, HEAD_W)

    # small-vector slab: per-layer (bias, gamma, beta) rows + head-bias row, padded to VEC_W lanes
    rows = []
    for (_, b, g, be) in params["layers"]:
        for v in (b, g, be):
            rows.append(jnp.zeros((1, VEC_W), jnp.float32).at[:, :HIDDEN].set(v))
    rows.append(jnp.zeros((1, VEC_W), jnp.float32).at[:, :HEAD_W].set(head_b))
    vec_slab = jnp.concatenate(rows, axis=0)                          # (3*N_LAYERS+1, VEC_W)

    return x_slab, w_slab, vec_slab, head_w


@jax.jit
def mdn_loss_pallas(data, context, params):
    x_slab, w_slab, vec_slab, head_w = _pack_inputs(data, context, params)
    vmem = pltpu.MemorySpace.VMEM
    loss = pl.pallas_call(
        mdn_forward_kernel,
        out_shape=jax.ShapeDtypeStruct((1, 1), jnp.float32),
        in_specs=[pl.BlockSpec(memory_space=vmem) for _ in range(4)],
        out_specs=pl.BlockSpec(memory_space=vmem),
    )(x_slab, w_slab, vec_slab, head_w)
    return loss[0, 0]


# ------------------------------ pure-JAX reference ---------------------------------
def mdn_loss_reference(data, context, params):
    h = context
    for (W, b, g, be) in params["layers"]:
        z = h @ W + b
        a = jnp.where(z > 0.0, z, jnp.exp(jnp.minimum(z, 0.0)) - 1.0)
        mu = a.mean(0, keepdims=True)
        var = ((a - mu) ** 2).mean(0, keepdims=True)
        h = (a - mu) / jnp.sqrt(var + BN_EPS) * g + be
    logits = h @ params["Ww"] + params["bw"]
    means = (h @ params["Wm"] + params["bm"]).reshape(BATCH, N_COMPONENTS, DIM)
    cov = (h @ params["Wc"] + params["bc"]).reshape(BATCH, N_COMPONENTS, PER_COMP_COV)
    if SIGMOID_MEANS:
        means = jax.nn.sigmoid(means)
    cov_diag = jnp.exp(cov[:, :, :DIM]) + 1e-5
    cov_factor = cov[:, :, DIM:].reshape(BATCH, N_COMPONENTS, DIM, RANK)

    log_mix = jax.nn.log_softmax(logits, axis=1)
    diff = data[:, None, :] - means
    dinv_diff = diff / cov_diag
    term1 = jnp.sum(diff * dinv_diff, -1)
    Wt_Dinv = jnp.swapaxes(cov_factor, -1, -2) / cov_diag[:, :, None, :]
    cap = jnp.eye(RANK, dtype=jnp.float32) + Wt_Dinv @ cov_factor
    Ltri = jnp.linalg.cholesky(cap)
    b_vec = jnp.einsum("bkrd,bkd->bkr", Wt_Dinv, diff)
    y = jax.scipy.linalg.solve_triangular(Ltri, b_vec[..., None], lower=True)[..., 0]
    term2 = jnp.sum(y ** 2, -1)
    logdet = 2.0 * jnp.sum(jnp.log(jnp.diagonal(Ltri, axis1=-2, axis2=-1)), -1) \
        + jnp.sum(jnp.log(cov_diag), -1)
    comp_lp = -0.5 * (DIM * LOG2PI + logdet + term1 - term2)
    lp = jax.scipy.special.logsumexp(log_mix + comp_lp, axis=1)
    return -lp.mean()


# ------------------------------------- main -----------------------------------------
def init_params(key):
    params = {"layers": []}
    in_dims = [CONTEXT_DIM] + [HIDDEN] * (N_LAYERS - 1)
    for fan_in in in_dims:
        key, kw, kb = jax.random.split(key, 3)
        W = jax.random.normal(kw, (fan_in, HIDDEN), jnp.float32) / math.sqrt(fan_in)
        b = 0.01 * jax.random.normal(kb, (1, HIDDEN), jnp.float32)
        g = jnp.ones((1, HIDDEN), jnp.float32)       # BatchNorm gamma (PyTorch default)
        be = jnp.zeros((1, HIDDEN), jnp.float32)     # BatchNorm beta  (PyTorch default)
        params["layers"].append((W, b, g, be))
    head_sizes = {"w": N_COMPONENTS, "m": N_COMPONENTS * DIM, "c": N_COMPONENTS * PER_COMP_COV}
    for name, sz in head_sizes.items():
        key, kw, kb = jax.random.split(key, 3)
        params["W" + name] = jax.random.normal(kw, (HIDDEN, sz), jnp.float32) / math.sqrt(HIDDEN)
        params["b" + name] = 0.01 * jax.random.normal(kb, (1, sz), jnp.float32)
    return params


if __name__ == "__main__":
    key = jax.random.PRNGKey(0)
    key, kd, kc, kp = jax.random.split(key, 4)
    data = jax.random.normal(kd, (BATCH, DIM), jnp.float32)
    context = jax.random.normal(kc, (BATCH, CONTEXT_DIM), jnp.float32)
    params = init_params(kp)

    loss = jax.block_until_ready(mdn_loss_pallas(data, context, params))
    ref = jax.block_until_ready(mdn_loss_reference(data, context, params))

    np.testing.assert_allclose(np.asarray(loss), np.asarray(ref), rtol=1e-3, atol=1e-3)
    assert np.isfinite(np.asarray(loss))
    print("KERNEL_OK")
</pallas_src>

<mosaic_0001>
module attributes {stable_mosaic.version = 11 : i64} {
  func.func @mdn_forward_kernel(%arg0: memref<8x36xf32, #tpu.memory_space<vmem>>, %arg1: memref<96x32xf32, #tpu.memory_space<vmem>>, %arg2: memref<10x68xf32, #tpu.memory_space<vmem>>, %arg3: memref<32x68xf32, #tpu.memory_space<vmem>>, %arg4: memref<1x1xf32, #tpu.memory_space<vmem>>) attributes {dimension_semantics = [], scalar_prefetch = 0 : i64, scratch_operands = 0 : i64, tpu.core_type = #tpu.core_type<tc>} {
    %c0 = arith.constant 0 : index
    %c0_0 = arith.constant 0 : index
    %0 = vector.load %arg0[%c0, %c0_0] : memref<8x36xf32, #tpu.memory_space<vmem>>, vector<8x36xf32>
    %1 = vector.extract_strided_slice %0 {offsets = [0, 0], sizes = [8, 32], strides = [1, 1]} : vector<8x36xf32> to vector<8x32xf32>
    %2 = vector.extract_strided_slice %0 {offsets = [0, 32], sizes = [8, 4], strides = [1, 1]} : vector<8x36xf32> to vector<8x4xf32>
    %c0_1 = arith.constant 0 : index
    %c0_2 = arith.constant 0 : index
    %3 = vector.load %arg1[%c0_1, %c0_2] : memref<96x32xf32, #tpu.memory_space<vmem>>, vector<96x32xf32>
    %c0_3 = arith.constant 0 : index
    %c0_4 = arith.constant 0 : index
    %4 = vector.load %arg2[%c0_3, %c0_4] : memref<10x68xf32, #tpu.memory_space<vmem>>, vector<10x68xf32>
    %5 = vector.extract_strided_slice %3 {offsets = [0, 0], sizes = [32, 32], strides = [1, 1]} : vector<96x32xf32> to vector<32x32xf32>
    %6 = vector.extract_strided_slice %4 {offsets = [0, 0], sizes = [1, 32], strides = [1, 1]} : vector<10x68xf32> to vector<1x32xf32>
    %7 = vector.extract_strided_slice %4 {offsets = [1, 0], sizes = [1, 32], strides = [1, 1]} : vector<10x68xf32> to vector<1x32xf32>
    %8 = vector.extract_strided_slice %4 {offsets = [2, 0], sizes = [1, 32], strides = [1, 1]} : vector<10x68xf32> to vector<1x32xf32>
    %cst = arith.constant dense<0.000000e+00> : vector<8x32xf32>
    %9 = tpu.matmul %1, %5, %cst {dimension_numbers = #tpu.dot_dimension_numbers<[1], [0], [0], [1], [0, 0, 1, 1], [], []>} : vector<8x32xf32>, vector<32x32xf32>, vector<8x32xf32> -> vector<8x32xf32>
    %10 = vector.broadcast %6 : vector<1x32xf32> to vector<8x32xf32>
    %11 = arith.addf %9, %10 : vector<8x32xf32>
    %cst_5 = arith.constant 0.000000e+00 : f32
    %12 = vector.broadcast %cst_5 : f32 to vector<8x32xf32>
    %13 = arith.cmpf ogt, %11, %12 : vector<8x32xf32>
    %cst_6 = arith.constant 0.000000e+00 : f32
    %14 = vector.broadcast %cst_6 : f32 to vector<8x32xf32>
    %15 = arith.minimumf %11, %14 : vector<8x32xf32>
    %16 = math.exp %15 : vector<8x32xf32>
    %cst_7 = arith.constant 1.000000e+00 : f32
    %17 = vector.broadcast %cst_7 : f32 to vector<8x32xf32>
    %18 = arith.subf %16, %17 : vector<8x32xf32>
    %19 = arith.select %13, %11, %18 : vector<8x32xi1>, vector<8x32xf32>
    %cst_8 = arith.constant dense<0.000000e+00> : vector<32xf32>
    %20 = vector.multi_reduction <add>, %19, %cst_8 [0] : vector<8x32xf32> to vector<32xf32>
    %21 = vector.shape_cast %20 : vector<32xf32> to vector<1x32xf32>
    %cst_9 = arith.constant 8.000000e+00 : f32
    %22 = vector.broadcast %cst_9 : f32 to vector<1x32xf32>
    %23 = arith.divf %21, %22 : vector<1x32xf32>
    %24 = vector.broadcast %23 : vector<1x32xf32> to vector<8x32xf32>
    %25 = arith.subf %19, %24 : vector<8x32xf32>
    %26 = arith.mulf %25, %25 : vector<8x32xf32>
    %cst_10 = arith.constant dense<0.000000e+00> : vector<32xf32>
    %27 = vector.multi_reduction <add>, %26, %cst_10 [0] : vector<8x32xf32> to vector<32xf32>
    %28 = vector.shape_cast %27 : vector<32xf32> to vector<1x32xf32>
    %cst_11 = arith.constant 8.000000e+00 : f32
    %29 = vector.broadcast %cst_11 : f32 to vector<1x32xf32>
    %30 = arith.divf %28, %29 : vector<1x32xf32>
    %31 = vector.broadcast %23 : vector<1x32xf32> to vector<8x32xf32>
    %32 = arith.subf %19, %31 : vector<8x32xf32>
    %cst_12 = arith.constant 9.99999974E-6 : f32
    %33 = vector.broadcast %cst_12 : f32 to vector<1x32xf32>
    %34 = arith.addf %30, %33 : vector<1x32xf32>
    %35 = math.rsqrt %34 : vector<1x32xf32>
    %36 = vector.broadcast %35 : vector<1x32xf32> to vector<8x32xf32>
    %37 = arith.mulf %32, %36 : vector<8x32xf32>
    %38 = vector.broadcast %7 : vector<1x32xf32> to vector<8x32xf32>
    %39 = arith.mulf %37, %38 : vector<8x32xf32>
    %40 = vector.broadcast %8 : vector<1x32xf32> to vector<8x32xf32>
    %41 = arith.addf %39, %40 : vector<8x32xf32>
    %42 = vector.extract_strided_slice %3 {offsets = [32, 0], sizes = [32, 32], strides = [1, 1]} : vector<96x32xf32> to vector<32x32xf32>
    %43 = vector.extract_strided_slice %4 {offsets = [3, 0], sizes = [1, 32], strides = [1, 1]} : vector<10x68xf32> to vector<1x32xf32>
    %44 = vector.extract_strided_slice %4 {offsets = [4, 0], sizes = [1, 32], strides = [1, 1]} : vector<10x68xf32> to vector<1x32xf32>
    %45 = vector.extract_strided_slice %4 {offsets = [5, 0], sizes = [1, 32], strides = [1, 1]} : vector<10x68xf32> to vector<1x32xf32>
    %cst_13 = arith.constant dense<0.000000e+00> : vector<8x32xf32>
    %46 = tpu.matmul %41, %42, %cst_13 {dimension_numbers = #tpu.dot_dimension_numbers<[1], [0], [0], [1], [0, 0, 1, 1], [], []>} : vector<8x32xf32>, vector<32x32xf32>, vector<8x32xf32> -> vector<8x32xf32>
    %47 = vector.broadcast %43 : vector<1x32xf32> to vector<8x32xf32>
    %48 = arith.addf %46, %47 : vector<8x32xf32>
    %cst_14 = arith.constant 0.000000e+00 : f32
    %49 = vector.broadcast %cst_14 : f32 to vector<8x32xf32>
    %50 = arith.cmpf ogt, %48, %49 : vector<8x32xf32>
    %cst_15 = arith.constant 0.000000e+00 : f32
    %51 = vector.broadcast %cst_15 : f32 to vector<8x32xf32>
    %52 = arith.minimumf %48, %51 : vector<8x32xf32>
    %53 = math.exp %52 : vector<8x32xf32>
    %cst_16 = arith.constant 1.000000e+00 : f32
    %54 = vector.broadcast %cst_16 : f32 to vector<8x32xf32>
    %55 = arith.subf %53, %54 : vector<8x32xf32>
    %56 = arith.select %50, %48, %55 : vector<8x32xi1>, vector<8x32xf32>
    %cst_17 = arith.constant dense<0.000000e+00> : vector<32xf32>
    %57 = vector.multi_reduction <add>, %56, %cst_17 [0] : vector<8x32xf32> to vector<32xf32>
    %58 = vector.shape_cast %57 : vector<32xf32> to vector<1x32xf32>
    %cst_18 = arith.constant 8.000000e+00 : f32
    %59 = vector.broadcast %cst_18 : f32 to vector<1x32xf32>
    %60 = arith.divf %58, %59 : vector<1x32xf32>
    %61 = vector.broadcast %60 : vector<1x32xf32> to vector<8x32xf32>
    %62 = arith.subf %56, %61 : vector<8x32xf32>
    %63 = arith.mulf %62, %62 : vector<8x32xf32>
    %cst_19 = arith.constant dense<0.000000e+00> : vector<32xf32>
    %64 = vector.multi_reduction <add>, %63, %cst_19 [0] : vector<8x32xf32> to vector<32xf32>
    %65 = vector.shape_cast %64 : vector<32xf32> to vector<1x32xf32>
    %cst_20 = arith.constant 8.000000e+00 : f32
    %66 = vector.broadcast %cst_20 : f32 to vector<1x32xf32>
    %67 = arith.divf %65, %66 : vector<1x32xf32>
    %68 = vector.broadcast %60 : vector<1x32xf32> to vector<8x32xf32>
    %69 = arith.subf %56, %68 : vector<8x32xf32>
    %cst_21 = arith.constant 9.99999974E-6 : f32
    %70 = vector.broadcast %cst_21 : f32 to vector<1x32xf32>
    %71 = arith.addf %67, %70 : vector<1x32xf32>
    %72 = math.rsqrt %71 : vector<1x32xf32>
    %73 = vector.broadcast %72 : vector<1x32xf32> to vector<8x32xf32>
    %74 = arith.mulf %69, %73 : vector<8x32xf32>
    %75 = vector.broadcast %44 : vector<1x32xf32> to vector<8x32xf32>
    %76 = arith.mulf %74, %75 : vector<8x32xf32>
    %77 = vector.broadcast %45 : vector<1x32xf32> to vector<8x32xf32>
    %78 = arith.addf %76, %77 : vector<8x32xf32>
    %79 = vector.extract_strided_slice %3 {offsets = [64, 0], sizes = [32, 32], strides = [1, 1]} : vector<96x32xf32> to vector<32x32xf32>
    %80 = vector.extract_strided_slice %4 {offsets = [6, 0], sizes = [1, 32], strides = [1, 1]} : vector<10x68xf32> to vector<1x32xf32>
    %81 = vector.extract_strided_slice %4 {offsets = [7, 0], sizes = [1, 32], strides = [1, 1]} : vector<10x68xf32> to vector<1x32xf32>
    %82 = vector.extract_strided_slice %4 {offsets = [8, 0], sizes = [1, 32], strides = [1, 1]} : vector<10x68xf32> to vector<1x32xf32>
    %cst_22 = arith.constant dense<0.000000e+00> : vector<8x32xf32>
    %83 = tpu.matmul %78, %79, %cst_22 {dimension_numbers = #tpu.dot_dimension_numbers<[1], [0], [0], [1], [0, 0, 1, 1], [], []>} : vector<8x32xf32>, vector<32x32xf32>, vector<8x32xf32> -> vector<8x32xf32>
    %84 = vector.broadcast %80 : vector<1x32xf32> to vector<8x32xf32>
    %85 = arith.addf %83, %84 : vector<8x32xf32>
    %cst_23 = arith.constant 0.000000e+00 : f32
    %86 = vector.broadcast %cst_23 : f32 to vector<8x32xf32>
    %87 = arith.cmpf ogt, %85, %86 : vector<8x32xf32>
    %cst_24 = arith.constant 0.000000e+00 : f32
    %88 = vector.broadcast %cst_24 : f32 to vector<8x32xf32>
    %89 = arith.minimumf %85, %88 : vector<8x32xf32>
    %90 = math.exp %89 : vector<8x32xf32>
    %cst_25 = arith.constant 1.000000e+00 : f32
    %91 = vector.broadcast %cst_25 : f32 to vector<8x32xf32>
    %92 = arith.subf %90, %91 : vector<8x32xf32>
    %93 = arith.select %87, %85, %92 : vector<8x32xi1>, vector<8x32xf32>
    %cst_26 = arith.constant dense<0.000000e+00> : vector<32xf32>
    %94 = vector.multi_reduction <add>, %93, %cst_26 [0] : vector<8x32xf32> to vector<32xf32>
    %95 = vector.shape_cast %94 : vector<32xf32> to vector<1x32xf32>
    %cst_27 = arith.constant 8.000000e+00 : f32
    %96 = vector.broadcast %cst_27 : f32 to vector<1x32xf32>
    %97 = arith.divf %95, %96 : vector<1x32xf32>
    %98 = vector.broadcast %97 : vector<1x32xf32> to vector<8x32xf32>
    %99 = arith.subf %93, %98 : vector<8x32xf32>
    %100 = arith.mulf %99, %99 : vector<8x32xf32>
    %cst_28 = arith.constant dense<0.000000e+00> : vector<32xf32>
    %101 = vector.multi_reduction <add>, %100, %cst_28 [0] : vector<8x32xf32> to vector<32xf32>
    %102 = vector.shape_cast %101 : vector<32xf32> to vector<1x32xf32>
    %cst_29 = arith.constant 8.000000e+00 : f32
    %103 = vector.broadcast %cst_29 : f32 to vector<1x32xf32>
    %104 = arith.divf %102, %103 : vector<1x32xf32>
    %105 = vector.broadcast %97 : vector<1x32xf32> to vector<8x32xf32>
    %106 = arith.subf %93, %105 : vector<8x32xf32>
    %cst_30 = arith.constant 9.99999974E-6 : f32
    %107 = vector.broadcast %cst_30 : f32 to vector<1x32xf32>
    %108 = arith.addf %104, %107 : vector<1x32xf32>
    %109 = math.rsqrt %108 : vector<1x32xf32>
    %110 = vector.broadcast %109 : vector<1x32xf32> to vector<8x32xf32>
    %111 = arith.mulf %106, %110 : vector<8x32xf32>
    %112 = vector.broadcast %81 : vector<1x32xf32> to vector<8x32xf32>
    %113 = arith.mulf %111, %112 : vector<8x32xf32>
    %114 = vector.broadcast %82 : vector<1x32xf32> to vector<8x32xf32>
    %115 = arith.addf %113, %114 : vector<8x32xf32>
    %116 = vector.extract_strided_slice %4 {offsets = [9, 0], sizes = [1, 68], strides = [1, 1]} : vector<10x68xf32> to vector<1x68xf32>
    %c0_31 = arith.constant 0 : index
    %c0_32 = arith.constant 0 : index
    %117 = vector.load %arg3[%c0_31, %c0_32] : memref<32x68xf32, #tpu.memory_space<vmem>>, vector<32x68xf32>
    %cst_33 = arith.constant dense<0.000000e+00> : vector<8x68xf32>
    %118 = tpu.matmul %115, %117, %cst_33 {dimension_numbers = #tpu.dot_dimension_numbers<[1], [0], [0], [1], [0, 0, 1, 1], [], []>} : vector<8x32xf32>, vector<32x68xf32>, vector<8x68xf32> -> vector<8x68xf32>
    %119 = vector.broadcast %116 : vector<1x68xf32> to vector<8x68xf32>
    %120 = arith.addf %118, %119 : vector<8x68xf32>
    %121 = vector.extract_strided_slice %120 {offsets = [0, 0], sizes = [8, 16], strides = [1, 1]} : vector<8x68xf32> to vector<8x16xf32>
    %122 = vector.extract_strided_slice %120 {offsets = [0, 16], sizes = [8, 16], strides = [1, 1]} : vector<8x68xf32> to vector<8x16xf32>
    %123 = vector.extract_strided_slice %120 {offsets = [0, 32], sizes = [8, 16], strides = [1, 1]} : vector<8x68xf32> to vector<8x16xf32>
    %124 = vector.extract_strided_slice %120 {offsets = [0, 48], sizes = [8, 16], strides = [1, 1]} : vector<8x68xf32> to vector<8x16xf32>
    %125 = vector.extract_strided_slice %120 {offsets = [0, 64], sizes = [8, 4], strides = [1, 1]} : vector<8x68xf32> to vector<8x4xf32>
    %126 = vector.extract_strided_slice %2 {offsets = [0, 0], sizes = [8, 1], strides = [1, 1]} : vector<8x4xf32> to vector<8x1xf32>
    %127 = vector.extract_strided_slice %121 {offsets = [0, 0], sizes = [8, 4], strides = [1, 1]} : vector<8x16xf32> to vector<8x4xf32>
    %128 = vector.broadcast %126 : vector<8x1xf32> to vector<8x4xf32>
    %129 = arith.subf %128, %127 : vector<8x4xf32>
    %130 = vector.extract_strided_slice %2 {offsets = [0, 1], sizes = [8, 1], strides = [1, 1]} : vector<8x4xf32> to vector<8x1xf32>
    %131 = vector.extract_strided_slice %121 {offsets = [0, 4], sizes = [8, 4], strides = [1, 1]} : vector<8x16xf32> to vector<8x4xf32>
    %132 = vector.broadcast %130 : vector<8x1xf32> to vector<8x4xf32>
    %133 = arith.subf %132, %131 : vector<8x4xf32>
    %134 = vector.extract_strided_slice %2 {offsets = [0, 2], sizes = [8, 1], strides = [1, 1]} : vector<8x4xf32> to vector<8x1xf32>
    %135 = vector.extract_strided_slice %121 {offsets = [0, 8], sizes = [8, 4], strides = [1, 1]} : vector<8x16xf32> to vector<8x4xf32>
    %136 = vector.broadcast %134 : vector<8x1xf32> to vector<8x4xf32>
    %137 = arith.subf %136, %135 : vector<8x4xf32>
    %138 = vector.extract_strided_slice %2 {offsets = [0, 3], sizes = [8, 1], strides = [1, 1]} : vector<8x4xf32> to vector<8x1xf32>
    %139 = vector.extract_strided_slice %121 {offsets = [0, 12], sizes = [8, 4], strides = [1, 1]} : vector<8x16xf32> to vector<8x4xf32>
    %140 = vector.broadcast %138 : vector<8x1xf32> to vector<8x4xf32>
    %141 = arith.subf %140, %139 : vector<8x4xf32>
    %142 = tpu.concatenate %129, %133, %137, %141 in 1 : vector<8x4xf32>, vector<8x4xf32>, vector<8x4xf32>, vector<8x4xf32> -> vector<8x16xf32>
    %143 = math.exp %122 : vector<8x16xf32>
    %cst_34 = arith.constant 9.99999974E-6 : f32
    %144 = vector.broadcast %cst_34 : f32 to vector<8x16xf32>
    %145 = arith.addf %143, %144 : vector<8x16xf32>
    %cst_35 = arith.constant 1.000000e+00 : f32
    %146 = vector.broadcast %cst_35 : f32 to vector<8x16xf32>
    %147 = arith.divf %146, %145 : vector<8x16xf32>
    %148 = arith.mulf %142, %147 : vector<8x16xf32>
    %149 = math.log %145 : vector<8x16xf32>
    %150 = arith.mulf %142, %148 : vector<8x16xf32>
    %151 = vector.extract_strided_slice %150 {offsets = [0, 0], sizes = [8, 4], strides = [1, 1]} : vector<8x16xf32> to vector<8x4xf32>
    %152 = vector.extract_strided_slice %150 {offsets = [0, 4], sizes = [8, 4], strides = [1, 1]} : vector<8x16xf32> to vector<8x4xf32>
    %153 = arith.addf %151, %152 : vector<8x4xf32>
    %154 = vector.extract_strided_slice %150 {offsets = [0, 8], sizes = [8, 4], strides = [1, 1]} : vector<8x16xf32> to vector<8x4xf32>
    %155 = arith.addf %153, %154 : vector<8x4xf32>
    %156 = vector.extract_strided_slice %150 {offsets = [0, 12], sizes = [8, 4], strides = [1, 1]} : vector<8x16xf32> to vector<8x4xf32>
    %157 = arith.addf %155, %156 : vector<8x4xf32>
    %158 = arith.mulf %123, %148 : vector<8x16xf32>
    %159 = vector.extract_strided_slice %158 {offsets = [0, 0], sizes = [8, 4], strides = [1, 1]} : vector<8x16xf32> to vector<8x4xf32>
    %160 = vector.extract_strided_slice %158 {offsets = [0, 4], sizes = [8, 4], strides = [1, 1]} : vector<8x16xf32> to vector<8x4xf32>
    %161 = arith.addf %159, %160 : vector<8x4xf32>
    %162 = vector.extract_strided_slice %158 {offsets = [0, 8], sizes = [8, 4], strides = [1, 1]} : vector<8x16xf32> to vector<8x4xf32>
    %163 = arith.addf %161, %162 : vector<8x4xf32>
    %164 = vector.extract_strided_slice %158 {offsets = [0, 12], sizes = [8, 4], strides = [1, 1]} : vector<8x16xf32> to vector<8x4xf32>
    %165 = arith.addf %163, %164 : vector<8x4xf32>
    %166 = arith.mulf %124, %148 : vector<8x16xf32>
    %167 = vector.extract_strided_slice %166 {offsets = [0, 0], sizes = [8, 4], strides = [1, 1]} : vector<8x16xf32> to vector<8x4xf32>
    %168 = vector.extract_strided_slice %166 {offsets = [0, 4], sizes = [8, 4], strides = [1, 1]} : vector<8x16xf32> to vector<8x4xf32>
    %169 = arith.addf %167, %168 : vector<8x4xf32>
    %170 = vector.extract_strided_slice %166 {offsets = [0, 8], sizes = [8, 4], strides = [1, 1]} : vector<8x16xf32> to vector<8x4xf32>
    %171 = arith.addf %169, %170 : vector<8x4xf32>
    %172 = vector.extract_strided_slice %166 {offsets = [0, 12], sizes = [8, 4], strides = [1, 1]} : vector<8x16xf32> to vector<8x4xf32>
    %173 = arith.addf %171, %172 : vector<8x4xf32>
    %174 = arith.mulf %123, %123 : vector<8x16xf32>
    %175 = arith.mulf %174, %147 : vector<8x16xf32>
    %176 = vector.extract_strided_slice %175 {offsets = [0, 0], sizes = [8, 4], strides = [1, 1]} : vector<8x16xf32> to vector<8x4xf32>
    %177 = vector.extract_strided_slice %175 {offsets = [0, 4], sizes = [8, 4], strides = [1, 1]} : vector<8x16xf32> to vector<8x4xf32>
    %178 = arith.addf %176, %177 : vector<8x4xf32>
    %179 = vector.extract_strided_slice %175 {offsets = [0, 8], sizes = [8, 4], strides = [1, 1]} : vector<8x16xf32> to vector<8x4xf32>
    %180 = arith.addf %178, %179 : vector<8x4xf32>
    %181 = vector.extract_strided_slice %175 {offsets = [0, 12], sizes = [8, 4], strides = [1, 1]} : vector<8x16xf32> to vector<8x4xf32>
    %182 = arith.addf %180, %181 : vector<8x4xf32>
    %cst_36 = arith.constant 1.000000e+00 : f32
    %183 = vector.broadcast %cst_36 : f32 to vector<8x4xf32>
    %184 = arith.addf %182, %183 : vector<8x4xf32>
    %185 = arith.mulf %124, %124 : vector<8x16xf32>
    %186 = arith.mulf %185, %147 : vector<8x16xf32>
    %187 = vector.extract_strided_slice %186 {offsets = [0, 0], sizes = [8, 4], strides = [1, 1]} : vector<8x16xf32> to vector<8x4xf32>
    %188 = vector.extract_strided_slice %186 {offsets = [0, 4], sizes = [8, 4], strides = [1, 1]} : vector<8x16xf32> to vector<8x4xf32>
    %189 = arith.addf %187, %188 : vector<8x4xf32>
    %190 = vector.extract_strided_slice %186 {offsets = [0, 8], sizes = [8, 4], strides = [1, 1]} : vector<8x16xf32> to vector<8x4xf32>
    %191 = arith.addf %189, %190 : vector<8x4xf32>
    %192 = vector.extract_strided_slice %186 {offsets = [0, 12], sizes = [8, 4], strides = [1, 1]} : vector<8x16xf32> to vector<8x4xf32>
    %193 = arith.addf %191, %192 : vector<8x4xf32>
    %cst_37 = arith.constant 1.000000e+00 : f32
    %194 = vector.broadcast %cst_37 : f32 to vector<8x4xf32>
    %195 = arith.addf %193, %194 : vector<8x4xf32>
    %196 = arith.mulf %123, %124 : vector<8x16xf32>
    %197 = arith.mulf %196, %147 : vector<8x16xf32>
    %198 = vector.extract_strided_slice %197 {offsets = [0, 0], sizes = [8, 4], strides = [1, 1]} : vector<8x16xf32> to vector<8x4xf32>
    %199 = vector.extract_strided_slice %197 {offsets = [0, 4], sizes = [8, 4], strides = [1, 1]} : vector<8x16xf32> to vector<8x4xf32>
    %200 = arith.addf %198, %199 : vector<8x4xf32>
    %201 = vector.extract_strided_slice %197 {offsets = [0, 8], sizes = [8, 4], strides = [1, 1]} : vector<8x16xf32> to vector<8x4xf32>
    %202 = arith.addf %200, %201 : vector<8x4xf32>
    %203 = vector.extract_strided_slice %197 {offsets = [0, 12], sizes = [8, 4], strides = [1, 1]} : vector<8x16xf32> to vector<8x4xf32>
    %204 = arith.addf %202, %203 : vector<8x4xf32>
    %205 = vector.extract_strided_slice %149 {offsets = [0, 0], sizes = [8, 4], strides = [1, 1]} : vector<8x16xf32> to vector<8x4xf32>
    %206 = vector.extract_strided_slice %149 {offsets = [0, 4], sizes = [8, 4], strides = [1, 1]} : vector<8x16xf32> to vector<8x4xf32>
    %207 = arith.addf %205, %206 : vector<8x4xf32>
    %208 = vector.extract_strided_slice %149 {offsets = [0, 8], sizes = [8, 4], strides = [1, 1]} : vector<8x16xf32> to vector<8x4xf32>
    %209 = arith.addf %207, %208 : vector<8x4xf32>
    %210 = vector.extract_strided_slice %149 {offsets = [0, 12], sizes = [8, 4], strides = [1, 1]} : vector<8x16xf32> to vector<8x4xf32>
    %211 = arith.addf %209, %210 : vector<8x4xf32>
    %212 = arith.mulf %184, %195 : vector<8x4xf32>
    %213 = arith.mulf %204, %204 : vector<8x4xf32>
    %214 = arith.subf %212, %213 : vector<8x4xf32>
    %215 = arith.mulf %195, %165 : vector<8x4xf32>
    %216 = arith.mulf %215, %165 : vector<8x4xf32>
    %cst_38 = arith.constant 2.000000e+00 : f32
    %217 = vector.broadcast %cst_38 : f32 to vector<8x4xf32>
    %218 = arith.mulf %217, %204 : vector<8x4xf32>
    %219 = arith.mulf %218, %165 : vector<8x4xf32>
    %220 = arith.mulf %219, %173 : vector<8x4xf32>
    %221 = arith.subf %216, %220 : vector<8x4xf32>
    %222 = arith.mulf %184, %173 : vector<8x4xf32>
    %223 = arith.mulf %222, %173 : vector<8x4xf32>
    %224 = arith.addf %221, %223 : vector<8x4xf32>
    %225 = arith.divf %224, %214 : vector<8x4xf32>
    %226 = math.log %214 : vector<8x4xf32>
    %227 = arith.addf %226, %211 : vector<8x4xf32>
    %cst_39 = arith.constant 7.35150814 : f32
    %228 = vector.broadcast %cst_39 : f32 to vector<8x4xf32>
    %229 = arith.addf %228, %227 : vector<8x4xf32>
    %230 = arith.addf %229, %157 : vector<8x4xf32>
    %231 = arith.subf %230, %225 : vector<8x4xf32>
    %cst_40 = arith.constant -5.000000e-01 : f32
    %232 = vector.broadcast %cst_40 : f32 to vector<8x4xf32>
    %233 = arith.mulf %232, %231 : vector<8x4xf32>
    %cst_41 = arith.constant dense<0xFF800000> : vector<8xf32>
    %234 = vector.multi_reduction <maximumf>, %125, %cst_41 [1] : vector<8x4xf32> to vector<8xf32>
    %235 = vector.shape_cast %234 : vector<8xf32> to vector<8x1xf32>
    %236 = vector.broadcast %235 : vector<8x1xf32> to vector<8x4xf32>
    %237 = arith.subf %125, %236 : vector<8x4xf32>
    %238 = vector.broadcast %235 : vector<8x1xf32> to vector<8x4xf32>
    %239 = arith.subf %125, %238 : vector<8x4xf32>
    %240 = math.exp %239 : vector<8x4xf32>
    %cst_42 = arith.constant dense<0.000000e+00> : vector<8xf32>
    %241 = vector.multi_reduction <add>, %240, %cst_42 [1] : vector<8x4xf32> to vector<8xf32>
    %242 = vector.shape_cast %241 : vector<8xf32> to vector<8x1xf32>
    %243 = math.log %242 : vector<8x1xf32>
    %244 = vector.broadcast %243 : vector<8x1xf32> to vector<8x4xf32>
    %245 = arith.subf %237, %244 : vector<8x4xf32>
    %246 = arith.addf %245, %233 : vector<8x4xf32>
    %cst_43 = arith.constant dense<0xFF800000> : vector<8xf32>
    %247 = vector.multi_reduction <maximumf>, %246, %cst_43 [1] : vector<8x4xf32> to vector<8xf32>
    %248 = vector.shape_cast %247 : vector<8xf32> to vector<8x1xf32>
    %249 = vector.broadcast %248 : vector<8x1xf32> to vector<8x4xf32>
    %250 = arith.subf %246, %249 : vector<8x4xf32>
    %251 = math.exp %250 : vector<8x4xf32>
    %cst_44 = arith.constant dense<0.000000e+00> : vector<8xf32>
    %252 = vector.multi_reduction <add>, %251, %cst_44 [1] : vector<8x4xf32> to vector<8xf32>
    %253 = vector.shape_cast %252 : vector<8xf32> to vector<8x1xf32>
    %254 = math.log %253 : vector<8x1xf32>
    %255 = arith.addf %248, %254 : vector<8x1xf32>
    %cst_45 = arith.constant dense<0.000000e+00> : vector<1xf32>
    %256 = vector.multi_reduction <add>, %255, %cst_45 [0] : vector<8x1xf32> to vector<1xf32>
    %257 = vector.shape_cast %256 : vector<1xf32> to vector<1x1xf32>
    %cst_46 = arith.constant 8.000000e+00 : f32
    %258 = vector.broadcast %cst_46 : f32 to vector<1x1xf32>
    %259 = arith.divf %257, %258 : vector<1x1xf32>
    %cst_47 = arith.constant 0.000000e+00 : f32
    %260 = vector.broadcast %cst_47 : f32 to vector<1x1xf32>
    %261 = arith.subf %260, %259 : vector<1x1xf32>
    %c0_48 = arith.constant 0 : index
    %c0_49 = arith.constant 0 : index
    %262 = vector.load %arg4[%c0_48, %c0_49] : memref<1x1xf32, #tpu.memory_space<vmem>>, vector<1x1xf32>
    tpu.vector_store %arg4[%c0_48, %c0_49], %261 {strides = array<i32>} : memref<1x1xf32, #tpu.memory_space<vmem>>, vector<1x1xf32>,
    return
  }
}

</mosaic_0001>

<llo_original>
// kernel: mdn_loss_pallas.1
$region0: #{mdn_loss_pallas.1}
  #allocation0 [shape = 'u32[]', space=smem, size = 0x4, offset = 0x4, fixed_abs, tag = 'smem constant byte address 0x4 - core index']
  #allocation1 [shape = 'u32[144,128]{1,0:T(1,128)}', space=vmem, size = 0x12000, scoped, tag = 'internal scratch']
  %s0 = inlined_call_operand.vmem [shape: f32[8,36], index: 0, kind: input, shape index: {}]
  %s1 = inlined_call_operand.vmem [shape: f32[96,32], index: 1, kind: input, shape index: {}]
  %s2 = inlined_call_operand.vmem [shape: f32[10,68], index: 2, kind: input, shape index: {}]
  %s3 = inlined_call_operand.vmem [shape: f32[32,68], index: 3, kind: input, shape index: {}]
  %s4 = inlined_call_operand.hbm [shape: f32[1,1], index: 4, kind: output, shape index: {}]
  %s5 = sld [smem:[#allocation0]]
  $region26: #{mdn_loss_pallas.1} parent=0
    _
  %s7 = ssub.s32 1, %s5
  %s8 = scalar_select 0, %s7, %s5
  $region1: #{mdn_loss_pallas.1} parent=0
    #allocation2 [shape = 'u8[512]{0}', space=vmem, size = 0x400, scoped, tag = 'output window, operand 0, single buffered']
    #allocation3 [shape = 's32[1]{0}', space=sflag, size = 0x4, scoped, tag = 'scoped memory for mdn_loss_pallas.1']
    %9 = vsyncpa [#allocation3], 0
    // Predicated region
    $region2: #{mdn_loss_pallas.1} parent=1 // pred_check
      _
    $region3: #{mdn_loss_pallas.1} parent=1 // pred_check_branch
      %11 = sbr.rel (0) target = $region5
    $region4: #{mdn_loss_pallas.1} parent=1 // pred_region
      _
    $region5: #{mdn_loss_pallas.1} parent=1 // pred_fallthru
      _
    // Predicated region
    $region6: #{mdn_loss_pallas.1} parent=1 // pred_check
      _
    $region7: #{mdn_loss_pallas.1} parent=1 // pred_check_branch
      %13 = sbr.rel (0) target = $region9
    $region8: #{mdn_loss_pallas.1} parent=1 // pred_region
      _
    $region9: #{mdn_loss_pallas.1} parent=1 // pred_fallthru
      _
    // Predicated region
    $region10: #{mdn_loss_pallas.1} parent=1 // pred_check
      _
    $region11: #{mdn_loss_pallas.1} parent=1 // pred_check_branch
      %15 = sbr.rel (0) target = $region13
    $region12: #{mdn_loss_pallas.1} parent=1 // pred_region
      _
    $region13: #{mdn_loss_pallas.1} parent=1 // pred_fallthru
      _
    // Predicated region
    $region14: #{mdn_loss_pallas.1} parent=1 // pred_check
      _
    $region15: #{mdn_loss_pallas.1} parent=1 // pred_check_branch
      %17 = sbr.rel (0) target = $region17
    $region16: #{mdn_loss_pallas.1} parent=1 // pred_region
      _
    $region17: #{mdn_loss_pallas.1} parent=1 // pred_fallthru
      _
    %v18 = vld [vmem:[%s0] sm:$0xff]
    %v19 = vld [vmem:[%s1] sm:$0xff]
    %v20 = vld [vmem:[%s1 + $0x8] sm:$0xff]
    %v21 = vld [vmem:[%s1 + $0x10] sm:$0xff]
    %v22 = vld [vmem:[%s1 + $0x18] sm:$0xff]
    %v23 = vld [vmem:[%s1 + $0x20] sm:$0xff]
    %v24 = vld [vmem:[%s1 + $0x28] sm:$0xff]
    %v25 = vld [vmem:[%s1 + $0x30] sm:$0xff]
    %v26 = vld [vmem:[%s1 + $0x38] sm:$0xff]
    %v27 = vld [vmem:[%s1 + $0x40] sm:$0xff]
    %v28 = vld [vmem:[%s1 + $0x48] sm:$0xff]
    %v29 = vld [vmem:[%s1 + $0x50] sm:$0xff]
    %v30 = vld [vmem:[%s1 + $0x58] sm:$0xff]
    %v31 = vld [vmem:[%s2] sm:$0xff]
    %v32 = vld [vmem:[%s2 + $0x8] sm:$0x3]
    %v33 = vlaneseq
    %v34 = vshrl.u32 %v33, 7
    %v35 = vsub.s32 0, %v34
    %v36 = vrot.slane %v31, %v35
    %vm37 = vcmask 261120
    %v39 = vsel %vm37, %v18, 0
    %41 = vmatprep.subr.mxu0 0.0
    %42 = vmatpush1.msra.mxu0 0.0
    %43 = vmatprep.subr.mxu0 0.0
    %44 = vmatpush1.msra.mxu0 0.0
    %45 = vmatprep.subr.mxu0 0.0
    %46 = vmatpush1.msra.mxu0 0.0
    %47 = vmatprep.subr.mxu0 0.0
    %48 = vmatpush1.msra.mxu0 0.0
    %49 = vmatprep.subr.mxu0 0.0
    %50 = vmatpush1.msra.mxu0 0.0
    %51 = vmatprep.subr.mxu0 0.0
    %52 = vmatpush1.msra.mxu0 0.0
    %53 = vmatprep.subr.mxu0 0.0
    %54 = vmatpush1.msra.mxu0 0.0
    %55 = vmatprep.subr.mxu0 0.0
    %56 = vmatpush1.msra.mxu0 0.0
    %57 = vmatprep.subr.mxu0 0.0
    %58 = vmatpush1.msra.mxu0 0.0
    %59 = vmatprep.subr.mxu0 0.0
    %60 = vmatpush1.msra.mxu0 0.0
    %61 = vmatprep.subr.mxu0 0.0
    %62 = vmatpush1.msra.mxu0 0.0
    %63 = vmatprep.subr.mxu0 0.0
    %64 = vmatpush1.msra.mxu0 0.0
    %65 = vmatprep.subr.mxu0 0.0
    %66 = vmatpush1.msra.mxu0 %v22
    %67 = vmatprep.subr.mxu0 0.0
    %68 = vmatpush1.msra.mxu0 %v21
    %69 = vmatprep.subr.mxu0 0.0
    %70 = vmatpush1.msra.mxu0 %v20
    %71 = vmatprep.subr.mxu0 0.0
    %72 = vmatpush1.msra.mxu0 %v19
    %73 = vmatprep.subr.mxu0 0.0
    %74 = vmatpush2.msra.mxu0 0.0
    %75 = vmatprep.subr.mxu0 0.0
    %76 = vmatpush2.msra.mxu0 0.0
    %77 = vmatprep.subr.mxu0 0.0
    %78 = vmatpush2.msra.mxu0 0.0
    %79 = vmatprep.subr.mxu0 0.0
    %80 = vmatpush2.msra.mxu0 0.0
    %81 = vmatprep.subr.mxu0 0.0
    %82 = vmatpush2.msra.mxu0 0.0
    %83 = vmatprep.subr.mxu0 0.0
    %84 = vmatpush2.msra.mxu0 0.0
    %85 = vmatprep.subr.mxu0 0.0
    %86 = vmatpush2.msra.mxu0 0.0
    %87 = vmatprep.subr.mxu0 0.0
    %88 = vmatpush2.msra.mxu0 0.0
    %89 = vmatprep.subr.mxu0 0.0
    %90 = vmatpush2.msra.mxu0 0.0
    %91 = vmatprep.subr.mxu0 0.0
    %92 = vmatpush2.msra.mxu0 0.0
    %93 = vmatprep.subr.mxu0 0.0
    %94 = vmatpush2.msra.mxu0 0.0
    %95 = vmatprep.subr.mxu0 0.0
    %96 = vmatpush2.msra.mxu0 0.0
    %97 = vmatprep.subr.mxu0 0.0
    %98 = vmatpush2.msra.mxu0 0.0
    %99 = vmatprep.subr.mxu0 0.0
    %100 = vmatpush2.msra.mxu0 0.0
    %101 = vmatprep.subr.mxu0 0.0
    %102 = vmatpush2.msra.mxu0 0.0
    %103 = vmatprep.subr.mxu0 0.0
    %104 = vmatpush2.msra.mxu0 0.0
    %105 = vmatprep.mubr.f32.mxu0 0.0
    %106 = vmatmul.mubr.f32.gmra.mxu0 %v39
    %v107 = vpop.f32.mrf.mxu0
    %v108 = vadd.f32 %v36, %v107
    %v109 = vpop.f32.mrf.mxu0
    %110 = vdwg.mxu0
    %vm111 = vcmp.gt.f32.partialorder %v108, 0.0
    %v112 = vmin.f32 %v108, 0.0
    %v113 = vmul.f32 %v112, 1.442695
    %v114 = vpow.pop %v113
    %v115 = vsub.f32 %v114, 1.0
    %v116 = vsel %vm111, %v108, %v115
    %v117 = vsel %vm37, %v116, 0.0
    %v118 = vrot.slane %v117, 4
    %v119 = vadd.f32 %v117, %v118
    %v120 = vrot.slane %v119, 2
    %v121 = vadd.f32 %v119, %v120
    %v122 = vrot.slane %v121, 1
    %v123 = vadd.f32 %v121, %v122
    %v124 = vrcp.pop 8.0
    %v125 = vmul.f32 %v123, %v124
    %v126 = vsub.f32 %v116, %v125
    %v127 = vmul.f32 %v126, %v126
    %v128 = vsel %vm37, %v127, 0.0
    %v129 = vrot.slane %v128, 4
    %v130 = vadd.f32 %v128, %v129
    %v131 = vrot.slane %v130, 2
    %v132 = vadd.f32 %v130, %v131
    %v133 = vrot.slane %v132, 1
    %v134 = vadd.f32 %v132, %v133
    %v135 = vmul.f32 %v134, %v124
    %v136 = vadd.f32 %v135, 1e-05
    %v137 = vrsqrt.pop %v136
    %v138 = vmul.f32 %v126, %v137
    %v139 = vlaneseq
    %v140 = vshrl.u32 %v139, 7
    %v141 = vsub.s32 1, %v140
    %v142 = vrot.slane %v31, %v141
    %v143 = vmul.f32 %v138, %v142
    %v144 = vlaneseq
    %v145 = vshrl.u32 %v144, 7
    %v146 = vsub.s32 2, %v145
    %v147 = vrot.slane %v31, %v146
    %v148 = vadd.f32 %v143, %v147
    %v149 = vlaneseq
    %v150 = vshrl.u32 %v149, 7
    %v151 = vsub.s32 3, %v150
    %v152 = vrot.slane %v31, %v151
    %v154 = vsel %vm37, %v148, 0
    %156 = vmatprep.subr.mxu0 0.0
    %157 = vmatpush1.msra.mxu0 0.0
    %158 = vmatprep.subr.mxu0 0.0
    %159 = vmatpush1.msra.mxu0 0.0
    %160 = vmatprep.subr.mxu0 0.0
    %161 = vmatpush1.msra.mxu0 0.0
    %162 = vmatprep.subr.mxu0 0.0
    %163 = vmatpush1.msra.mxu0 0.0
    %164 = vmatprep.subr.mxu0 0.0
    %165 = vmatpush1.msra.mxu0 0.0
    %166 = vmatprep.subr.mxu0 0.0
    %167 = vmatpush1.msra.mxu0 0.0
    %168 = vmatprep.subr.mxu0 0.0
    %169 = vmatpush1.msra.mxu0 0.0
    %170 = vmatprep.subr.mxu0 0.0
    %171 = vmatpush1.msra.mxu0 0.0
    %172 = vmatprep.subr.mxu0 0.0
    %173 = vmatpush1.msra.mxu0 0.0
    %174 = vmatprep.subr.mxu0 0.0
    %175 = vmatpush1.msra.mxu0 0.0
    %176 = vmatprep.subr.mxu0 0.0
    %177 = vmatpush1.msra.mxu0 0.0
    %178 = vmatprep.subr.mxu0 0.0
    %179 = vmatpush1.msra.mxu0 0.0
    %180 = vmatprep.subr.mxu0 0.0
    %181 = vmatpush1.msra.mxu0 %v26
    %182 = vmatprep.subr.mxu0 0.0
    %183 = vmatpush1.msra.mxu0 %v25
    %184 = vmatprep.subr.mxu0 0.0
    %185 = vmatpush1.msra.mxu0 %v24
    %186 = vmatprep.subr.mxu0 0.0
    %187 = vmatpush1.msra.mxu0 %v23
    %188 = vmatprep.subr.mxu0 0.0
    %189 = vmatpush2.msra.mxu0 0.0
    %190 = vmatprep.subr.mxu0 0.0
    %191 = vmatpush2.msra.mxu0 0.0
    %192 = vmatprep.subr.mxu0 0.0
    %193 = vmatpush2.msra.mxu0 0.0
    %194 = vmatprep.subr.mxu0 0.0
    %195 = vmatpush2.msra.mxu0 0.0
    %196 = vmatprep.subr.mxu0 0.0
    %197 = vmatpush2.msra.mxu0 0.0
    %198 = vmatprep.subr.mxu0 0.0
    %199 = vmatpush2.msra.mxu0 0.0
    %200 = vmatprep.subr.mxu0 0.0
    %201 = vmatpush2.msra.mxu0 0.0
    %202 = vmatprep.subr.mxu0 0.0
    %203 = vmatpush2.msra.mxu0 0.0
    %204 = vmatprep.subr.mxu0 0.0
    %205 = vmatpush2.msra.mxu0 0.0
    %206 = vmatprep.subr.mxu0 0.0
    %207 = vmatpush2.msra.mxu0 0.0
    %208 = vmatprep.subr.mxu0 0.0
    %209 = vmatpush2.msra.mxu0 0.0
    %210 = vmatprep.subr.mxu0 0.0
    %211 = vmatpush2.msra.mxu0 0.0
    %212 = vmatprep.subr.mxu0 0.0
    %213 = vmatpush2.msra.mxu0 0.0
    %214 = vmatprep.subr.mxu0 0.0
    %215 = vmatpush2.msra.mxu0 0.0
    %216 = vmatprep.subr.mxu0 0.0
    %217 = vmatpush2.msra.mxu0 0.0
    %218 = vmatprep.subr.mxu0 0.0
    %219 = vmatpush2.msra.mxu0 0.0
    %220 = vmatprep.mubr.f32.mxu0 0.0
    %221 = vmatmul.mubr.f32.gmra.mxu0 %v154
    %v222 = vpop.f32.mrf.mxu0
    %v223 = vadd.f32 %v152, %v222
    %v224 = vpop.f32.mrf.mxu0
    %225 = vdwg.mxu0
    %vm226 = vcmp.gt.f32.partialorder %v223, 0.0
    %v227 = vmin.f32 %v223, 0.0
    %v228 = vmul.f32 %v227, 1.442695
    %v229 = vpow.pop %v228
    %v230 = vsub.f32 %v229, 1.0
    %v231 = vsel %vm226, %v223, %v230
    %v232 = vsel %vm37, %v231, 0.0
    %v233 = vrot.slane %v232, 4
    %v234 = vadd.f32 %v232, %v233
    %v235 = vrot.slane %v234, 2
    %v236 = vadd.f32 %v234, %v235
    %v237 = vrot.slane %v236, 1
    %v238 = vadd.f32 %v236, %v237
    %v239 = vmul.f32 %v238, %v124
    %v240 = vsub.f32 %v231, %v239
    %v241 = vmul.f32 %v240, %v240
    %v242 = vsel %vm37, %v241, 0.0
    %v243 = vrot.slane %v242, 4
    %v244 = vadd.f32 %v242, %v243
    %v245 = vrot.slane %v244, 2
    %v246 = vadd.f32 %v244, %v245
    %v247 = vrot.slane %v246, 1
    %v248 = vadd.f32 %v246, %v247
    %v249 = vmul.f32 %v248, %v124
    %v250 = vadd.f32 %v249, 1e-05
    %v251 = vrsqrt.pop %v250
    %v252 = vmul.f32 %v240, %v251
    %v253 = vlaneseq
    %v254 = vshrl.u32 %v253, 7
    %v255 = vsub.s32 4, %v254
    %v256 = vrot.slane %v31, %v255
    %v257 = vmul.f32 %v252, %v256
    %v258 = vlaneseq
    %v259 = vshrl.u32 %v258, 7
    %v260 = vsub.s32 5, %v259
    %v261 = vrot.slane %v31, %v260
    %v262 = vadd.f32 %v257, %v261
    %v263 = vlaneseq
    %v264 = vshrl.u32 %v263, 7
    %v265 = vsub.s32 6, %v264
    %v266 = vrot.slane %v31, %v265
    %v268 = vsel %vm37, %v262, 0
    %270 = vmatprep.subr.mxu0 0.0
    %271 = vmatpush1.msra.mxu0 0.0
    %272 = vmatprep.subr.mxu0 0.0
    %273 = vmatpush1.msra.mxu0 0.0
    %274 = vmatprep.subr.mxu0 0.0
    %275 = vmatpush1.msra.mxu0 0.0
    %276 = vmatprep.subr.mxu0 0.0
    %277 = vmatpush1.msra.mxu0 0.0
    %278 = vmatprep.subr.mxu0 0.0
    %279 = vmatpush1.msra.mxu0 0.0
    %280 = vmatprep.subr.mxu0 0.0
    %281 = vmatpush1.msra.mxu0 0.0
    %282 = vmatprep.subr.mxu0 0.0
    %283 = vmatpush1.msra.mxu0 0.0
    %284 = vmatprep.subr.mxu0 0.0
    %285 = vmatpush1.msra.mxu0 0.0
    %286 = vmatprep.subr.mxu0 0.0
    %287 = vmatpush1.msra.mxu0 0.0
    %288 = vmatprep.subr.mxu0 0.0
    %289 = vmatpush1.msra.mxu0 0.0
    %290 = vmatprep.subr.mxu0 0.0
    %291 = vmatpush1.msra.mxu0 0.0
    %292 = vmatprep.subr.mxu0 0.0
    %293 = vmatpush1.msra.mxu0 0.0
    %294 = vmatprep.subr.mxu0 0.0
    %295 = vmatpush1.msra.mxu0 %v30
    %296 = vmatprep.subr.mxu0 0.0
    %297 = vmatpush1.msra.mxu0 %v29
    %298 = vmatprep.subr.mxu0 0.0
    %299 = vmatpush1.msra.mxu0 %v28
    %300 = vmatprep.subr.mxu0 0.0
    %301 = vmatpush1.msra.mxu0 %v27
    %302 = vmatprep.subr.mxu0 0.0
    %303 = vmatpush2.msra.mxu0 0.0
    %304 = vmatprep.subr.mxu0 0.0
    %305 = vmatpush2.msra.mxu0 0.0
    %306 = vmatprep.subr.mxu0 0.0
    %307 = vmatpush2.msra.mxu0 0.0
    %308 = vmatprep.subr.mxu0 0.0
    %309 = vmatpush2.msra.mxu0 0.0
    %310 = vmatprep.subr.mxu0 0.0
    %311 = vmatpush2.msra.mxu0 0.0
    %312 = vmatprep.subr.mxu0 0.0
    %313 = vmatpush2.msra.mxu0 0.0
    %314 = vmatprep.subr.mxu0 0.0
    %315 = vmatpush2.msra.mxu0 0.0
    %316 = vmatprep.subr.mxu0 0.0
    %317 = vmatpush2.msra.mxu0 0.0
    %318 = vmatprep.subr.mxu0 0.0
    %319 = vmatpush2.msra.mxu0 0.0
    %320 = vmatprep.subr.mxu0 0.0
    %321 = vmatpush2.msra.mxu0 0.0
    %322 = vmatprep.subr.mxu0 0.0
    %323 = vmatpush2.msra.mxu0 0.0
    %324 = vmatprep.subr.mxu0 0.0
    %325 = vmatpush2.msra.mxu0 0.0
    %326 = vmatprep.subr.mxu0 0.0
    %327 = vmatpush2.msra.mxu0 0.0
    %328 = vmatprep.subr.mxu0 0.0
    %329 = vmatpush2.msra.mxu0 0.0
    %330 = vmatprep.subr.mxu0 0.0
    %331 = vmatpush2.msra.mxu0 0.0
    %332 = vmatprep.subr.mxu0 0.0
    %333 = vmatpush2.msra.mxu0 0.0
    %334 = vmatprep.mubr.f32.mxu0 0.0
    %335 = vmatmul.mubr.f32.gmra.mxu0 %v268
    %v336 = vpop.f32.mrf.mxu0
    %v337 = vadd.f32 %v266, %v336
    %v338 = vpop.f32.mrf.mxu0
    %339 = vdwg.mxu0
    %vm340 = vcmp.gt.f32.partialorder %v337, 0.0
    %v341 = vmin.f32 %v337, 0.0
    %v342 = vmul.f32 %v341, 1.442695
    %v343 = vpow.pop %v342
    %v344 = vsub.f32 %v343, 1.0
    %v345 = vsel %vm340, %v337, %v344
    %v346 = vsel %vm37, %v345, 0.0
    %v347 = vrot.slane %v346, 4
    %v348 = vadd.f32 %v346, %v347
    %v349 = vrot.slane %v348, 2
    %v350 = vadd.f32 %v348, %v349
    %v351 = vrot.slane %v350, 1
    %v352 = vadd.f32 %v350, %v351
    %v353 = vmul.f32 %v352, %v124
    %v354 = vsub.f32 %v345, %v353
    %v355 = vmul.f32 %v354, %v354
    %v356 = vsel %vm37, %v355, 0.0
    %v357 = vrot.slane %v356, 4
    %v358 = vadd.f32 %v356, %v357
    %v359 = vrot.slane %v358, 2
    %v360 = vadd.f32 %v358, %v359
    %v361 = vrot.slane %v360, 1
    %v362 = vadd.f32 %v360, %v361
    %v363 = vmul.f32 %v362, %v124
    %v364 = vadd.f32 %v363, 1e-05
    %v365 = vrsqrt.pop %v364
    %v366 = vmul.f32 %v354, %v365
    %v367 = vlaneseq
    %v368 = vshrl.u32 %v367, 7
    %v369 = vsub.s32 7, %v368
    %v370 = vrot.slane %v31, %v369
    %v371 = vmul.f32 %v366, %v370
    %v372 = vlaneseq
    %v373 = vshrl.u32 %v372, 7
    %v374 = vsub.s32 0, %v373
    %v375 = vrot.slane %v32, %v374
    %v376 = vadd.f32 %v371, %v375
    %v377 = vld [vmem:[%s3] sm:$0xff]
    %v378 = vld [vmem:[%s3 + $0x8] sm:$0xff]
    %v379 = vld [vmem:[%s3 + $0x10] sm:$0xff]
    %v380 = vld [vmem:[%s3 + $0x18] sm:$0xff]
    %v381 = vlaneseq
    %v382 = vshrl.u32 %v381, 7
    %v383 = vsub.s32 1, %v382
    %v384 = vrot.slane %v32, %v383
    %v386 = vsel %vm37, %v376, 0
    %388 = vmatprep.subr.mxu0 0.0
    %389 = vmatpush1.msra.mxu0 0.0
    %390 = vmatprep.subr.mxu0 0.0
    %391 = vmatpush1.msra.mxu0 0.0
    %392 = vmatprep.subr.mxu0 0.0
    %393 = vmatpush1.msra.mxu0 0.0
    %394 = vmatprep.subr.mxu0 0.0
    %395 = vmatpush1.msra.mxu0 0.0
    %396 = vmatprep.subr.mxu0 0.0
    %397 = vmatpush1.msra.mxu0 0.0
    %398 = vmatprep.subr.mxu0 0.0
    %399 = vmatpush1.msra.mxu0 0.0
    %400 = vmatprep.subr.mxu0 0.0
    %401 = vmatpush1.msra.mxu0 0.0
    %402 = vmatprep.subr.mxu0 0.0
    %403 = vmatpush1.msra.mxu0 0.0
    %404 = vmatprep.subr.mxu0 0.0
    %405 = vmatpush1.msra.mxu0 0.0
    %406 = vmatprep.subr.mxu0 0.0
    %407 = vmatpush1.msra.mxu0 0.0
    %408 = vmatprep.subr.mxu0 0.0
    %409 = vmatpush1.msra.mxu0 0.0
    %410 = vmatprep.subr.mxu0 0.0
    %411 = vmatpush1.msra.mxu0 0.0
    %412 = vmatprep.subr.mxu0 0.0
    %413 = vmatpush1.msra.mxu0 %v380
    %414 = vmatprep.subr.mxu0 0.0
    %415 = vmatpush1.msra.mxu0 %v379
    %416 = vmatprep.subr.mxu0 0.0
    %417 = vmatpush1.msra.mxu0 %v378
    %418 = vmatprep.subr.mxu0 0.0
    %419 = vmatpush1.msra.mxu0 %v377
    %420 = vmatprep.subr.mxu0 0.0
    %421 = vmatpush2.msra.mxu0 0.0
    %422 = vmatprep.subr.mxu0 0.0
    %423 = vmatpush2.msra.mxu0 0.0
    %424 = vmatprep.subr.mxu0 0.0
    %425 = vmatpush2.msra.mxu0 0.0
    %426 = vmatprep.subr.mxu0 0.0
    %427 = vmatpush2.msra.mxu0 0.0
    %428 = vmatprep.subr.mxu0 0.0
    %429 = vmatpush2.msra.mxu0 0.0
    %430 = vmatprep.subr.mxu0 0.0
    %431 = vmatpush2.msra.mxu0 0.0
    %432 = vmatprep.subr.mxu0 0.0
    %433 = vmatpush2.msra.mxu0 0.0
    %434 = vmatprep.subr.mxu0 0.0
    %435 = vmatpush2.msra.mxu0 0.0
    %436 = vmatprep.subr.mxu0 0.0
    %437 = vmatpush2.msra.mxu0 0.0
    %438 = vmatprep.subr.mxu0 0.0
    %439 = vmatpush2.msra.mxu0 0.0
    %440 = vmatprep.subr.mxu0 0.0
    %441 = vmatpush2.msra.mxu0 0.0
    %442 = vmatprep.subr.mxu0 0.0
    %443 = vmatpush2.msra.mxu0 0.0
    %444 = vmatprep.subr.mxu0 0.0
    %445 = vmatpush2.msra.mxu0 0.0
    %446 = vmatprep.subr.mxu0 0.0
    %447 = vmatpush2.msra.mxu0 0.0
    %448 = vmatprep.subr.mxu0 0.0
    %449 = vmatpush2.msra.mxu0 0.0
    %450 = vmatprep.subr.mxu0 0.0
    %451 = vmatpush2.msra.mxu0 0.0
    %452 = vmatprep.mubr.f32.mxu0 0.0
    %453 = vmatmul.mubr.f32.gmra.mxu0 %v386
    %v454 = vpop.f32.mrf.mxu0
    %v455 = vadd.f32 %v384, %v454
    %v456 = vpop.f32.mrf.mxu0
    %457 = vdwg.mxu0
    %458 = vset.pattern.permute.xlu0 32
    %459 = vperm.xlu0 %458, %v18
    %v460 = vpop.permute.xlu0 %459
    %v462 = vsub.f32 %v460, %v455
    %463 = vset.pattern.permute.xlu0 33
    %464 = vperm.xlu0 %463, %v18
    %v465 = vpop.permute.xlu0 %464
    %v467 = vsub.f32 %v465, %v455
    %468 = vset.pattern.permute.xlu0 34
    %469 = vperm.xlu0 %468, %v18
    %v470 = vpop.permute.xlu0 %469
    %v472 = vsub.f32 %v470, %v455
    %473 = vset.pattern.permute.xlu0 35
    %474 = vperm.xlu0 %473, %v18
    %v475 = vpop.permute.xlu0 %474
    %v477 = vsub.f32 %v475, %v455
    %vm478 = vcmask 31744
    %v479 = vsel %vm478, %v462, %v467
    %vm480 = vcmask 64512
    %v481 = vsel %vm480, %v479, %v472
    %vm482 = vcmask 97280
    %v483 = vsel %vm482, %v481, %v477
    %v484 = vmul.f32 %v455, 1.442695
    %v485 = vpow.pop %v484
    %v486 = vadd.f32 %v485, 1e-05
    %v487 = vrcp.pop %v486
    %v488 = vmul.f32 1.0, %v487
    %490 = vrot.lane.b32.xlu0 %v488, 112
    %v491 = vpop.permute.xlu0 %490
    %v493 = vmul.f32 %v483, %v491
    %v494 = vlog2.pop %v486
    %v495 = vmul.f32 %v494, 0.6931472
    %v496 = vmul.f32 %v483, %v493
    %498 = vrot.lane.b32.xlu0 %v496, 124
    %v499 = vpop.permute.xlu0 %498
    %v501 = vadd.f32 %v496, %v499
    %502 = vrot.lane.b32.xlu0 %v496, 120
    %v503 = vpop.permute.xlu0 %502
    %v505 = vadd.f32 %v501, %v503
    %506 = vrot.lane.b32.xlu0 %v496, 116
    %v507 = vpop.permute.xlu0 %506
    %v509 = vadd.f32 %v505, %v507
    %511 = vrot.lane.b32.xlu0 %v493, 32
    %v512 = vpop.permute.xlu0 %511
    %v514 = vmul.f32 %v455, %v512
    %516 = vrot.lane.b32.xlu0 %v514, 124
    %v517 = vpop.permute.xlu0 %516
    %v519 = vadd.f32 %v514, %v517
    %520 = vrot.lane.b32.xlu0 %v514, 120
    %v521 = vpop.permute.xlu0 %520
    %v523 = vadd.f32 %v519, %v521
    %524 = vrot.lane.b32.xlu0 %v514, 116
    %v525 = vpop.permute.xlu0 %524
    %v527 = vadd.f32 %v523, %v525
    %528 = vrot.lane.b32.xlu0 %v493, 48
    %v529 = vpop.permute.xlu0 %528
    %v531 = vmul.f32 %v455, %v529
    %533 = vrot.lane.b32.xlu0 %v531, 124
    %v534 = vpop.permute.xlu0 %533
    %v536 = vadd.f32 %v531, %v534
    %537 = vrot.lane.b32.xlu0 %v531, 120
    %v538 = vpop.permute.xlu0 %537
    %v540 = vadd.f32 %v536, %v538
    %541 = vrot.lane.b32.xlu0 %v531, 116
    %v542 = vpop.permute.xlu0 %541
    %v544 = vadd.f32 %v540, %v542
    %v545 = vmul.f32 %v455, %v455
    %546 = vrot.lane.b32.xlu0 %v488, 16
    %v547 = vpop.permute.xlu0 %546
    %v549 = vmul.f32 %v545, %v547
    %551 = vrot.lane.b32.xlu0 %v549, 124
    %v552 = vpop.permute.xlu0 %551
    %v554 = vadd.f32 %v549, %v552
    %555 = vrot.lane.b32.xlu0 %v549, 120
    %v556 = vpop.permute.xlu0 %555
    %v558 = vadd.f32 %v554, %v556
    %559 = vrot.lane.b32.xlu0 %v549, 116
    %v560 = vpop.permute.xlu0 %559
    %v562 = vadd.f32 %v558, %v560
    %v563 = vadd.f32 %v562, 1.0
    %564 = vrot.lane.b32.xlu0 %v488, 32
    %v565 = vpop.permute.xlu0 %564
    %v567 = vmul.f32 %v545, %v565
    %569 = vrot.lane.b32.xlu0 %v567, 124
    %v570 = vpop.permute.xlu0 %569
    %v572 = vadd.f32 %v567, %v570
    %573 = vrot.lane.b32.xlu0 %v567, 120
    %v574 = vpop.permute.xlu0 %573
    %v576 = vadd.f32 %v572, %v574
    %577 = vrot.lane.b32.xlu0 %v567, 116
    %v578 = vpop.permute.xlu0 %577
    %v580 = vadd.f32 %v576, %v578
    %v581 = vadd.f32 %v580, 1.0
    %583 = vrot.lane.b32.xlu0 %v455, 112
    %v584 = vpop.permute.xlu0 %583
    %v586 = vmul.f32 %v455, %v584
    %v587 = vmul.f32 %v586, %v547
    %589 = vrot.lane.b32.xlu0 %v587, 124
    %v590 = vpop.permute.xlu0 %589
    %v592 = vadd.f32 %v587, %v590
    %593 = vrot.lane.b32.xlu0 %v587, 120
    %v594 = vpop.permute.xlu0 %593
    %v596 = vadd.f32 %v592, %v594
    %597 = vrot.lane.b32.xlu0 %v587, 116
    %v598 = vpop.permute.xlu0 %597
    %v600 = vadd.f32 %v596, %v598
    %602 = vrot.lane.b32.xlu0 %v495, 124
    %v603 = vpop.permute.xlu0 %602
    %v605 = vadd.f32 %v495, %v603
    %606 = vrot.lane.b32.xlu0 %v495, 120
    %v607 = vpop.permute.xlu0 %606
    %v609 = vadd.f32 %v605, %v607
    %610 = vrot.lane.b32.xlu0 %v495, 116
    %v611 = vpop.permute.xlu0 %610
    %v613 = vadd.f32 %v609, %v611
    %615 = vrot.lane.b32.xlu0 %v581, 112
    %v616 = vpop.permute.xlu0 %615
    %v618 = vmul.f32 %v563, %v616
    %v619 = vmul.f32 %v600, %v600
    %v620 = vsub.f32 %v618, %v619
    %622 = vrot.lane.b32.xlu0 %v527, 16
    %v623 = vpop.permute.xlu0 %622
    %v625 = vmul.f32 %v581, %v623
    %v626 = vmul.f32 %v625, %v623
    %v627 = vmul.f32 %v600, 2.0
    %v628 = vmul.f32 %v627, %v527
    %630 = vrot.lane.b32.xlu0 %v544, 112
    %v631 = vpop.permute.xlu0 %630
    %v633 = vmul.f32 %v628, %v631
    %635 = vrot.lane.b32.xlu0 %v633, 16
    %v636 = vpop.permute.xlu0 %635
    %v638 = vsub.f32 %v626, %v636
    %v639 = vmul.f32 %v563, %v631
    %v640 = vmul.f32 %v639, %v631
    %642 = vrot.lane.b32.xlu0 %v640, 16
    %v643 = vpop.permute.xlu0 %642
    %v645 = vadd.f32 %v638, %v643
    %647 = vrot.lane.b32.xlu0 %v620, 16
    %v648 = vpop.permute.xlu0 %647
    %v650 = vrcp.pop %v648
    %v651 = vmul.f32 %v645, %v650
    %v652 = vlog2.pop %v620
    %v653 = vmul.f32 %v652, 0.6931472
    %655 = vrot.lane.b32.xlu0 %v613, 16
    %v656 = vpop.permute.xlu0 %655
    %v658 = vadd.f32 %v653, %v656
    %v659 = vadd.f32 %v658, 7.351508
    %661 = vrot.lane.b32.xlu0 %v509, 32
    %v662 = vpop.permute.xlu0 %661
    %v664 = vadd.f32 %v659, %v662
    %666 = vrot.lane.b32.xlu0 %v651, 112
    %v667 = vpop.permute.xlu0 %666
    %v669 = vsub.f32 %v664, %v667
    %v670 = vmul.f32 %v669, -0.5
    %vm671 = vcmask 556544
    %v672 = vsel %vm671, %v455, -inf
    %673 = vmax.xlane.f32.xlu0 %v672
    %v674 = vpop.xlane.xlu0 %673
    %v675 = vsub.f32 %v455, %v674
    %v676 = vmul.f32 %v675, 1.442695
    %v677 = vpow.pop %v676
    %679 = vrot.lane.b32.xlu0 %v677, 64
    %v680 = vpop.permute.xlu0 %679
    %v682 = vsel %vm478, %v680, 0.0
    %683 = vadd.xlane.f32.xlu0 %v682
    %v684 = vpop.xlane.xlu0 %683
    %v685 = vlog2.pop %v684
    %v686 = vmul.f32 %v685, 0.6931472
    %v687 = vsub.f32 %v675, %v686
    %689 = vrot.lane.b32.xlu0 %v670, 32
    %v690 = vpop.permute.xlu0 %689
    %v692 = vadd.f32 %v687, %v690
    %v693 = vsel %vm671, %v692, -inf
    %694 = vmax.xlane.f32.xlu0 %v693
    %v695 = vpop.xlane.xlu0 %694
    %v696 = vsub.f32 %v692, %v695
    %v697 = vmul.f32 %v696, 1.442695
    %v698 = vpow.pop %v697
    %700 = vrot.lane.b32.xlu0 %v698, 64
    %v701 = vpop.permute.xlu0 %700
    %v703 = vsel %vm478, %v701, 0.0
    %704 = vadd.xlane.f32.xlu0 %v703
    %v705 = vpop.xlane.xlu0 %704
    %v706 = vlog2.pop %v705
    %v707 = vmul.f32 %v706, 0.6931472
    %v708 = vadd.f32 %v695, %v707
    %v709 = vrot.slane %v708, 4
    %v710 = vadd.f32 %v708, %v709
    %v711 = vrot.slane %v710, 2
    %v712 = vadd.f32 %v710, %v711
    %v713 = vrot.slane %v712, 1
    %v714 = vadd.f32 %v712, %v713
    %v715 = vmul.f32 %v714, %v124
    %v716 = vsub.f32 0.0, %v715
    %vm717 = vcmask 0
    %718 = vst.msk [vmem:[#allocation2] sm:$0x1] %vm717, %v716
    // Predicated region
    $region18: #{mdn_loss_pallas.1} parent=1 // pred_check
      _
    $region19: #{mdn_loss_pallas.1} parent=1 // pred_check_branch
      %720 = sbr.rel (0) target = $region21
    $region20: #{mdn_loss_pallas.1} parent=1 // pred_region
      %s722 = ssub.s32 16, 16
      %723 = vsyncadd [#allocation3], %s722
      %s725 = sshll.u32 [#allocation2], 4
      %s726 = int_to_ptr.vmem [resolvable:$true] %s725
      %728 = dma.vmem_to_hbm [thread:$0]  %s726, 16, %s4, [#allocation3]
    $region21: #{mdn_loss_pallas.1} parent=1 // pred_fallthru
      _
    // Predicated region
    $region22: #{mdn_loss_pallas.1} parent=1 // pred_check
      _
    $region23: #{mdn_loss_pallas.1} parent=1 // pred_check_branch
      %730 = sbr.rel (0) target = $region25
    $region24: #{mdn_loss_pallas.1} parent=1 // pred_region
      %731 = dma.done [#allocation3], 16
    $region25: #{mdn_loss_pallas.1} parent=1 // pred_fallthru
      _
    %732 = vsyncpa [#allocation3], 1

</llo_original>
